<compile_context>
chip_gen: v7x
topology: tpu7x:2x2x1
jax: 0.10.0
libtpu: 0.0.40
codegen_flags: <defaults>
</compile_context>

<pallas_src>
import functools

import jax
import jax.numpy as jnp
from jax.experimental import pallas as pl
from jax.experimental.pallas import tpu as pltpu

_LANE = 128
_SUBLANE = 8
_VMEM_BUDGET_BYTES = 40 * 1024 * 1024   # conservative: fits v7x 64 MiB VMEM
_VMEM_LIMIT_BYTES = 48 * 1024 * 1024    # raised scoped limit (<= v7x physical)
_MAX_BATCH_TILE = 4096


def _round_up(x, m):
    return (x + m - 1) // m * m


# ----------------------------------------------------------------------------
# Fused Pallas kernel: Linear -> ReLU -> Linear -> (mu, logvar) split at store
# ----------------------------------------------------------------------------
def _mlp_encoder_kernel(x_ref, w1_ref, b1_ref, w2_ref, b2_ref, mu_ref, lv_ref):
    # (tb, indim) @ (indim, hiddim_p) on the MXU, bias + ReLU on the VPU.
    h = jnp.dot(x_ref[...], w1_ref[...], preferred_element_type=jnp.float32)
    h = jnp.maximum(h + b1_ref[...], 0.0)
    # ONE MXU pass for both heads: (tb, hiddim_p) @ (hiddim_p, 2*outdim_p).
    o = jnp.dot(h, w2_ref[...], preferred_element_type=jnp.float32) + b2_ref[...]
    # Split at the store; outdim_p is a multiple of 128 so both halves are
    # lane-dense (no masked partial stores, no cross-lane shuffles).
    outdim_p = mu_ref.shape[-1]
    mu_ref[...] = o[:, :outdim_p]
    lv_ref[...] = o[:, outdim_p:]


# ----------------------------------------------------------------------------
# Wrapper (pallas_call plumbing), jitted.  Shapes are static under jit, so
# all tile selection happens at trace time with plain Python ints.
# ----------------------------------------------------------------------------
@functools.partial(jax.jit, static_argnames=("outdim",))
def mlp_encoder_forward(x, params, *, outdim):
    B, indim = x.shape
    w1, b1 = params["w1"], params["b1"]
    w2, b2 = params["w2"], params["b2"]
    hiddim_p = w1.shape[1]
    two_outdim_p = w2.shape[1]
    outdim_p = two_outdim_p // 2

    # ---- batch tile selection (VMEM-budget driven, multiple of 8) ----------
    # Weights are double-buffered by the pipeline even though their block
    # index is constant; activations/outputs are double-buffered too.
    weight_bytes = 2 * 4 * (indim * hiddim_p + hiddim_p
                            + hiddim_p * two_outdim_p + two_outdim_p)
    per_row_bytes = 4 * (2 * indim            # x (double-buffered)
                         + 2 * two_outdim_p   # mu + lv (double-buffered)
                         + hiddim_p           # h intermediate
                         + two_outdim_p)      # o intermediate
    avail = max(_VMEM_BUDGET_BYTES - weight_bytes, per_row_bytes * _SUBLANE)
    tb_cap = max(_SUBLANE, (avail // per_row_bytes) // _SUBLANE * _SUBLANE)
    tb_cap = min(tb_cap, _MAX_BATCH_TILE)

    tb = min(tb_cap, _round_up(B, _SUBLANE))
    # If the whole batch fits one tile but is big enough, split into >= 2
    # grid steps so the "parallel" axis can use both v7x TensorCores.
    if B <= tb and _round_up(B, _SUBLANE) >= 2 * _SUBLANE:
        tb = _round_up((_round_up(B, _SUBLANE) + 1) // 2, _SUBLANE)
    b_padded = _round_up(B, tb)
    grid = (b_padded // tb,)

    x_p = x if b_padded == B else jnp.pad(x, ((0, b_padded - B), (0, 0)))

    batched = lambda i: (i, 0)
    const = lambda i: (0, 0)

    cost = pl.CostEstimate(
        flops=2 * b_padded * indim * hiddim_p
              + 2 * b_padded * hiddim_p * two_outdim_p,
        transcendentals=0,
        bytes_accessed=4 * (b_padded * indim
                            + indim * hiddim_p + hiddim_p
                            + hiddim_p * two_outdim_p + two_outdim_p
                            + 2 * b_padded * outdim_p),
    )

    mu_p, lv_p = pl.pallas_call(
        _mlp_encoder_kernel,
        out_shape=(jax.ShapeDtypeStruct((b_padded, outdim_p), jnp.float32),
                   jax.ShapeDtypeStruct((b_padded, outdim_p), jnp.float32)),
        grid_spec=pltpu.PrefetchScalarGridSpec(
            num_scalar_prefetch=0,
            grid=grid,
            in_specs=[
                pl.BlockSpec((tb, indim), batched),             # x
                pl.BlockSpec((indim, hiddim_p), const),         # W1 (padded)
                pl.BlockSpec((1, hiddim_p), const),             # b1 (padded)
                pl.BlockSpec((hiddim_p, two_outdim_p), const),  # W2 (both heads)
                pl.BlockSpec((1, two_outdim_p), const),         # b2 (both heads)
            ],
            out_specs=[
                pl.BlockSpec((tb, outdim_p), batched),          # mu (padded)
                pl.BlockSpec((tb, outdim_p), batched),          # logvar (padded)
            ],
        ),
        compiler_params=pltpu.CompilerParams(
            dimension_semantics=("parallel",),
            vmem_limit_bytes=_VMEM_LIMIT_BYTES),
        cost_estimate=cost,
    )(x_p, w1, b1, w2, b2)

    # Strip batch/output padding (cheap XLA slices, fused under jit).
    return mu_p[:B, :outdim], lv_p[:B, :outdim]


# ----------------------------------------------------------------------------
# Parameter init: head split + lane-density padding hoisted to init time.
# Zero padding is numerically exact: ReLU(0) = 0 and zero rows of W2
# contribute nothing; padded output columns are sliced off after the kernel.
# ----------------------------------------------------------------------------
def init_mlp_encoder_params(key, indim, hiddim, outdim):
    k1, k2, k3, k4 = jax.random.split(key, 4)
    w1 = 0.1 * jax.random.normal(k1, (indim, hiddim), jnp.float32)
    b1 = 0.1 * jax.random.normal(k2, (1, hiddim), jnp.float32)
    w2 = 0.1 * jax.random.normal(k3, (hiddim, 2 * outdim), jnp.float32)
    b2 = 0.1 * jax.random.normal(k4, (1, 2 * outdim), jnp.float32)

    hiddim_p = _round_up(hiddim, _LANE)
    outdim_p = _round_up(outdim, _LANE)

    w1_p = jnp.zeros((indim, hiddim_p), jnp.float32).at[:, :hiddim].set(w1)
    b1_p = jnp.zeros((1, hiddim_p), jnp.float32).at[:, :hiddim].set(b1)

    w2_p = jnp.zeros((hiddim_p, 2 * outdim_p), jnp.float32)
    w2_p = w2_p.at[:hiddim, :outdim].set(w2[:, :outdim])                       # mu head
    w2_p = w2_p.at[:hiddim, outdim_p:outdim_p + outdim].set(w2[:, outdim:])    # logvar head
    b2_p = jnp.zeros((1, 2 * outdim_p), jnp.float32)
    b2_p = b2_p.at[:, :outdim].set(b2[:, :outdim])
    b2_p = b2_p.at[:, outdim_p:outdim_p + outdim].set(b2[:, outdim:])

    params = {"w1": w1_p, "b1": b1_p, "w2": w2_p, "b2": b2_p}
    full = {"w1": w1, "b1": b1, "w2": w2, "b2": b2}
    return params, full


def _reference_forward(x, full, outdim):
    h = jnp.maximum(x @ full["w1"] + full["b1"], 0.0)
    o = h @ full["w2"] + full["b2"]
    return o[:, :outdim], o[:, outdim:]


# ----------------------------------------------------------------------------
if __name__ == "__main__":
    B, indim, hiddim, outdim = 2, 32, 32, 16

    key = jax.random.PRNGKey(0)
    kp, kx = jax.random.split(key)
    params, full = init_mlp_encoder_params(kp, indim, hiddim, outdim)
    x = jax.random.normal(kx, (B, indim), jnp.float32)

    mu, logvar = mlp_encoder_forward(x, params, outdim=outdim)
    mu, logvar = jax.block_until_ready((mu, logvar))

    assert mu.shape == (B, outdim), mu.shape
    assert logvar.shape == (B, outdim), logvar.shape
    assert bool(jnp.all(jnp.isfinite(mu)))
    assert bool(jnp.all(jnp.isfinite(logvar)))

    ref_mu, ref_lv = _reference_forward(x, full, outdim)
    assert bool(jnp.allclose(mu, ref_mu, atol=1e-5, rtol=1e-5))
    assert bool(jnp.allclose(logvar, ref_lv, atol=1e-5, rtol=1e-5))

    print("KERNEL_OK")
</pallas_src>

<mosaic_0001>
module attributes {stable_mosaic.version = 11 : i64} {
  func.func @_mlp_encoder_kernel(%arg0: i32, %arg1: memref<8x32xf32, #tpu.memory_space<vmem>>, %arg2: memref<32x128xf32, #tpu.memory_space<vmem>>, %arg3: memref<1x128xf32, #tpu.memory_space<vmem>>, %arg4: memref<128x256xf32, #tpu.memory_space<vmem>>, %arg5: memref<1x256xf32, #tpu.memory_space<vmem>>, %arg6: memref<8x128xf32, #tpu.memory_space<vmem>>, %arg7: memref<8x128xf32, #tpu.memory_space<vmem>>) attributes {dimension_semantics = [#tpu.dimension_semantics<parallel>], iteration_bounds = array<i64: 1>, scalar_prefetch = 0 : i64, scratch_operands = 0 : i64, tpu.core_type = #tpu.core_type<tc>, window_params = [{transform_indices = @transform_0, window_bounds = array<i64: 8, 32>}, {pipeline_mode = #tpu.pipeline_mode<synchronous>, transform_indices = @transform_1, window_bounds = array<i64: 32, 128>}, {pipeline_mode = #tpu.pipeline_mode<synchronous>, transform_indices = @transform_2, window_bounds = array<i64: 1, 128>}, {pipeline_mode = #tpu.pipeline_mode<synchronous>, transform_indices = @transform_3, window_bounds = array<i64: 128, 256>}, {pipeline_mode = #tpu.pipeline_mode<synchronous>, transform_indices = @transform_4, window_bounds = array<i64: 1, 256>}, {transform_indices = @transform_5, window_bounds = array<i64: 8, 128>}, {transform_indices = @transform_6, window_bounds = array<i64: 8, 128>}]} {
    %c0 = arith.constant 0 : index
    %c0_0 = arith.constant 0 : index
    %0 = vector.load %arg1[%c0, %c0_0] : memref<8x32xf32, #tpu.memory_space<vmem>>, vector<8x32xf32>
    %c0_1 = arith.constant 0 : index
    %c0_2 = arith.constant 0 : index
    %1 = vector.load %arg2[%c0_1, %c0_2] : memref<32x128xf32, #tpu.memory_space<vmem>>, vector<32x128xf32>
    %cst = arith.constant dense<0.000000e+00> : vector<8x128xf32>
    %2 = tpu.matmul %0, %1, %cst {dimension_numbers = #tpu.dot_dimension_numbers<[1], [0], [0], [1], [0, 0, 1, 1], [], []>} : vector<8x32xf32>, vector<32x128xf32>, vector<8x128xf32> -> vector<8x128xf32>
    %c0_3 = arith.constant 0 : index
    %c0_4 = arith.constant 0 : index
    %3 = vector.load %arg3[%c0_3, %c0_4] : memref<1x128xf32, #tpu.memory_space<vmem>>, vector<1x128xf32>
    %4 = vector.broadcast %3 : vector<1x128xf32> to vector<8x128xf32>
    %5 = arith.addf %2, %4 : vector<8x128xf32>
    %cst_5 = arith.constant 0.000000e+00 : f32
    %6 = vector.broadcast %cst_5 : f32 to vector<8x128xf32>
    %7 = arith.maximumf %5, %6 : vector<8x128xf32>
    %c0_6 = arith.constant 0 : index
    %c0_7 = arith.constant 0 : index
    %8 = vector.load %arg4[%c0_6, %c0_7] : memref<128x256xf32, #tpu.memory_space<vmem>>, vector<128x256xf32>
    %cst_8 = arith.constant dense<0.000000e+00> : vector<8x256xf32>
    %9 = tpu.matmul %7, %8, %cst_8 {dimension_numbers = #tpu.dot_dimension_numbers<[1], [0], [0], [1], [0, 0, 1, 1], [], []>} : vector<8x128xf32>, vector<128x256xf32>, vector<8x256xf32> -> vector<8x256xf32>
    %c0_9 = arith.constant 0 : index
    %c0_10 = arith.constant 0 : index
    %10 = vector.load %arg5[%c0_9, %c0_10] : memref<1x256xf32, #tpu.memory_space<vmem>>, vector<1x256xf32>
    %11 = vector.broadcast %10 : vector<1x256xf32> to vector<8x256xf32>
    %12 = arith.addf %9, %11 : vector<8x256xf32>
    %13 = vector.extract_strided_slice %12 {offsets = [0, 0], sizes = [8, 128], strides = [1, 1]} : vector<8x256xf32> to vector<8x128xf32>
    %c0_11 = arith.constant 0 : index
    %c0_12 = arith.constant 0 : index
    %14 = vector.load %arg6[%c0_11, %c0_12] : memref<8x128xf32, #tpu.memory_space<vmem>>, vector<8x128xf32>
    tpu.vector_store %arg6[%c0_11, %c0_12], %13 {strides = array<i32>} : memref<8x128xf32, #tpu.memory_space<vmem>>, vector<8x128xf32>,
    %15 = vector.extract_strided_slice %12 {offsets = [0, 128], sizes = [8, 128], strides = [1, 1]} : vector<8x256xf32> to vector<8x128xf32>
    %c0_13 = arith.constant 0 : index
    %c0_14 = arith.constant 0 : index
    %16 = vector.load %arg7[%c0_13, %c0_14] : memref<8x128xf32, #tpu.memory_space<vmem>>, vector<8x128xf32>
    tpu.vector_store %arg7[%c0_13, %c0_14], %15 {strides = array<i32>} : memref<8x128xf32, #tpu.memory_space<vmem>>, vector<8x128xf32>,
    return
  }
  func.func @transform_0(%arg0: i32) -> (i32, i32) {
    %c0_i32 = arith.constant 0 : i32
    %c0_i32_0 = arith.constant 0 : i32
    return %arg0, %c0_i32 : i32, i32
  }
  func.func @transform_1(%arg0: i32) -> (i32, i32) {
    %c0_i32 = arith.constant 0 : i32
    %c0_i32_0 = arith.constant 0 : i32
    %c0_i32_1 = arith.constant 0 : i32
    return %c0_i32, %c0_i32_0 : i32, i32
  }
  func.func @transform_2(%arg0: i32) -> (i32, i32) {
    %c0_i32 = arith.constant 0 : i32
    %c0_i32_0 = arith.constant 0 : i32
    %c0_i32_1 = arith.constant 0 : i32
    return %c0_i32, %c0_i32_0 : i32, i32
  }
  func.func @transform_3(%arg0: i32) -> (i32, i32) {
    %c0_i32 = arith.constant 0 : i32
    %c0_i32_0 = arith.constant 0 : i32
    %c0_i32_1 = arith.constant 0 : i32
    return %c0_i32, %c0_i32_0 : i32, i32
  }
  func.func @transform_4(%arg0: i32) -> (i32, i32) {
    %c0_i32 = arith.constant 0 : i32
    %c0_i32_0 = arith.constant 0 : i32
    %c0_i32_1 = arith.constant 0 : i32
    return %c0_i32, %c0_i32_0 : i32, i32
  }
  func.func @transform_5(%arg0: i32) -> (i32, i32) {
    %c0_i32 = arith.constant 0 : i32
    %c0_i32_0 = arith.constant 0 : i32
    return %arg0, %c0_i32 : i32, i32
  }
  func.func @transform_6(%arg0: i32) -> (i32, i32) {
    %c0_i32 = arith.constant 0 : i32
    %c0_i32_0 = arith.constant 0 : i32
    return %arg0, %c0_i32 : i32, i32
  }
}

</mosaic_0001>

<llo_original>
// kernel: mlp_encoder_forward.1
$region0: #{mlp_encoder_forward.1}
  #allocation0 [shape = 'u32[]', space=smem, size = 0x4, offset = 0x4, fixed_abs, tag = 'smem constant byte address 0x4 - core index']
  #allocation1 [shape = 'u32[144,128]{1,0:T(1,128)}', space=vmem, size = 0x12000, scoped, tag = 'internal scratch']
  %s0 = inlined_call_operand.vmem [shape: f32[8,32], index: 0, kind: input, shape index: {}]
  %s1 = inlined_call_operand.hbm [shape: f32[32,128], index: 1, kind: input, shape index: {}]
  %s2 = inlined_call_operand.vmem [shape: f32[1,128], index: 2, kind: input, shape index: {}]
  %s3 = inlined_call_operand.hbm [shape: f32[128,256], index: 3, kind: input, shape index: {}]
  %s4 = inlined_call_operand.vmem [shape: f32[1,256], index: 4, kind: input, shape index: {}]
  %s5 = inlined_call_operand.vmem [shape: f32[8,128], index: 5, kind: output, shape index: {0}]
  %s6 = inlined_call_operand.vmem [shape: f32[8,128], index: 6, kind: output, shape index: {1}]
  %7 = xla_tuple %s5, %s6
  %s8 = sld [smem:[#allocation0]]
  $region46: #{mlp_encoder_forward.1} parent=0
    _
  %s10 = ssub.s32 1, %s8
  %s11 = scalar_select 0, %s10, %s8
  $region1: #{mlp_encoder_forward.1} parent=0
    #allocation2 [shape = 'u8[16384]{0}', space=vmem, size = 0x4000, scoped, tag = 'input window, operand 1, single buffered']
    #allocation3 [shape = 's32[1]{0}', space=sflag, size = 0x4, scoped, tag = 'scoped memory for mlp_encoder_forward.1']
    #allocation4 [shape = 'u8[131072]{0}', space=vmem, size = 0x20000, scoped, tag = 'input window, operand 3, single buffered']
    #allocation5 [shape = 's32[1]{0}', space=sflag, size = 0x4, scoped, tag = 'scoped memory for mlp_encoder_forward.1']
    %12 = vsyncpa [#allocation3], 0
    %13 = vsyncpa [#allocation5], 0
    // Predicated region
    $region2: #{mlp_encoder_forward.1} parent=1 // pred_check
      _
    $region3: #{mlp_encoder_forward.1} parent=1 // pred_check_branch
      %15 = sbr.rel (0) target = $region5
    $region4: #{mlp_encoder_forward.1} parent=1 // pred_region
      _
    $region5: #{mlp_encoder_forward.1} parent=1 // pred_fallthru
      _
    // Predicated region
    $region6: #{mlp_encoder_forward.1} parent=1 // pred_check
      _
    $region7: #{mlp_encoder_forward.1} parent=1 // pred_check_branch
      %17 = sbr.rel (0) target = $region9
    $region8: #{mlp_encoder_forward.1} parent=1 // pred_region
      %s19 = ssub.s32 512, 512
      %20 = vsyncadd [#allocation3], %s19
      %s21 = sshll.u32 [#allocation2], 4
      %s22 = int_to_ptr.vmem [resolvable:$true] %s21
      %27 = dma.hbm_to_vmem [thread:$0]  %s1, 512, %s22, [#allocation3], 128, 128, 8
    $region9: #{mlp_encoder_forward.1} parent=1 // pred_fallthru
      _
    // Predicated region
    $region10: #{mlp_encoder_forward.1} parent=1 // pred_check
      _
    $region11: #{mlp_encoder_forward.1} parent=1 // pred_check_branch
      %29 = sbr.rel (0) target = $region13
    $region12: #{mlp_encoder_forward.1} parent=1 // pred_region
      _
    $region13: #{mlp_encoder_forward.1} parent=1 // pred_fallthru
      _
    // Predicated region
    $region14: #{mlp_encoder_forward.1} parent=1 // pred_check
      _
    $region15: #{mlp_encoder_forward.1} parent=1 // pred_check_branch
      %31 = sbr.rel (0) target = $region17
    $region16: #{mlp_encoder_forward.1} parent=1 // pred_region
      %s33 = ssub.s32 4096, 4096
      %34 = vsyncadd [#allocation5], %s33
      %s35 = sshll.u32 [#allocation4], 4
      %s36 = int_to_ptr.vmem [resolvable:$true] %s35
      %41 = dma.hbm_to_vmem [thread:$0]  %s3, 4096, %s36, [#allocation5], 256, 256, 16
    $region17: #{mlp_encoder_forward.1} parent=1 // pred_fallthru
      _
    // Predicated region
    $region18: #{mlp_encoder_forward.1} parent=1 // pred_check
      _
    $region19: #{mlp_encoder_forward.1} parent=1 // pred_check_branch
      %43 = sbr.rel (0) target = $region21
    $region20: #{mlp_encoder_forward.1} parent=1 // pred_region
      _
    $region21: #{mlp_encoder_forward.1} parent=1 // pred_fallthru
      _
    // Predicated region
    $region22: #{mlp_encoder_forward.1} parent=1 // pred_check
      _
    $region23: #{mlp_encoder_forward.1} parent=1 // pred_check_branch
      %45 = sbr.rel (0) target = $region25
    $region24: #{mlp_encoder_forward.1} parent=1 // pred_region
      %46 = dma.done [#allocation3], 512
    $region25: #{mlp_encoder_forward.1} parent=1 // pred_fallthru
      _
    // Predicated region
    $region26: #{mlp_encoder_forward.1} parent=1 // pred_check
      _
    $region27: #{mlp_encoder_forward.1} parent=1 // pred_check_branch
      %48 = sbr.rel (0) target = $region29
    $region28: #{mlp_encoder_forward.1} parent=1 // pred_region
      %49 = dma.done [#allocation5], 4096
    $region29: #{mlp_encoder_forward.1} parent=1 // pred_fallthru
      _
    %v50 = vld [vmem:[%s0] sm:$0xff]
    %v51 = vld [vmem:[#allocation2] sm:$0xff]
    %v52 = vld [vmem:[#allocation2 + $0x8] sm:$0xff]
    %v53 = vld [vmem:[#allocation2 + $0x10] sm:$0xff]
    %v54 = vld [vmem:[#allocation2 + $0x18] sm:$0xff]
    %v55 = vld [vmem:[%s2] sm:$0x1]
    %v57 = vlaneseq
    %v58 = vshrl.u32 %v57, 7
    %v59 = vsub.s32 0, %v58
    %v60 = vrot.slane %v55, %v59
    %vm62 = vcmask 261120
    %v64 = vsel %vm62, %v50, 0
    %66 = vmatprep.subr.mxu0 0.0
    %67 = vmatpush1.msra.mxu0 %v51
    %68 = vmatprep.subr.mxu0 0.0
    %69 = vmatpush1.msra.mxu0 %v52
    %70 = vmatprep.subr.mxu0 0.0
    %71 = vmatpush1.msra.mxu0 %v53
    %72 = vmatprep.subr.mxu0 0.0
    %73 = vmatpush1.msra.mxu0 %v54
    %74 = vmatprep.subr.mxu0 0.0
    %75 = vmatpush1.msra.mxu0 0.0
    %76 = vmatprep.subr.mxu0 0.0
    %77 = vmatpush1.msra.mxu0 0.0
    %78 = vmatprep.subr.mxu0 0.0
    %79 = vmatpush1.msra.mxu0 0.0
    %80 = vmatprep.subr.mxu0 0.0
    %81 = vmatpush1.msra.mxu0 0.0
    %82 = vmatprep.subr.mxu0 0.0
    %83 = vmatpush1.msra.mxu0 0.0
    %84 = vmatprep.subr.mxu0 0.0
    %85 = vmatpush1.msra.mxu0 0.0
    %86 = vmatprep.subr.mxu0 0.0
    %87 = vmatpush1.msra.mxu0 0.0
    %88 = vmatprep.subr.mxu0 0.0
    %89 = vmatpush1.msra.mxu0 0.0
    %90 = vmatprep.subr.mxu0 0.0
    %91 = vmatpush1.msra.mxu0 0.0
    %92 = vmatprep.subr.mxu0 0.0
    %93 = vmatpush1.msra.mxu0 0.0
    %94 = vmatprep.subr.mxu0 0.0
    %95 = vmatpush1.msra.mxu0 0.0
    %96 = vmatprep.subr.mxu0 0.0
    %97 = vmatpush1.msra.mxu0 0.0
    %98 = vmatprep.subr.mxu0 0.0
    %99 = vmatpush1.msra.mxu0 0.0
    %100 = vmatprep.subr.mxu0 0.0
    %101 = vmatpush1.msra.mxu0 0.0
    %102 = vmatprep.subr.mxu0 0.0
    %103 = vmatpush1.msra.mxu0 0.0
    %104 = vmatprep.subr.mxu0 0.0
    %105 = vmatpush1.msra.mxu0 0.0
    %106 = vmatprep.subr.mxu0 0.0
    %107 = vmatpush1.msra.mxu0 0.0
    %108 = vmatprep.subr.mxu0 0.0
    %109 = vmatpush1.msra.mxu0 0.0
    %110 = vmatprep.subr.mxu0 0.0
    %111 = vmatpush1.msra.mxu0 0.0
    %112 = vmatprep.subr.mxu0 0.0
    %113 = vmatpush1.msra.mxu0 0.0
    %114 = vmatprep.subr.mxu0 0.0
    %115 = vmatpush1.msra.mxu0 0.0
    %116 = vmatprep.subr.mxu0 0.0
    %117 = vmatpush1.msra.mxu0 0.0
    %118 = vmatprep.subr.mxu0 0.0
    %119 = vmatpush1.msra.mxu0 0.0
    %120 = vmatprep.subr.mxu0 0.0
    %121 = vmatpush1.msra.mxu0 0.0
    %122 = vmatprep.subr.mxu0 0.0
    %123 = vmatpush1.msra.mxu0 0.0
    %124 = vmatprep.subr.mxu0 0.0
    %125 = vmatpush1.msra.mxu0 0.0
    %126 = vmatprep.subr.mxu0 0.0
    %127 = vmatpush1.msra.mxu0 0.0
    %128 = vmatprep.subr.mxu0 0.0
    %129 = vmatpush1.msra.mxu0 0.0
    %130 = vmatprep.mubr.f32.mxu0 0.0
    %131 = vmatmul.mubr.f32.gmra.mrb[0].mxu0 %v64
    %v132 = vpop.f32.mrb[0].mxu0
    %v133 = vadd.f32 %v60, %v132
    %v134 = vpop.f32.mrb[0].mxu0
    %135 = vdwg.mxu0
    %v136 = vmax.f32 %v133, 0.0
    %v137 = vld [vmem:[#allocation4] sm:$0xff]
    %v138 = vld [vmem:[#allocation4 + $0x8] sm:$0xff]
    %v139 = vld [vmem:[#allocation4 + $0x10] sm:$0xff]
    %v140 = vld [vmem:[#allocation4 + $0x18] sm:$0xff]
    %v141 = vld [vmem:[#allocation4 + $0x20] sm:$0xff]
    %v142 = vld [vmem:[#allocation4 + $0x28] sm:$0xff]
    %v143 = vld [vmem:[#allocation4 + $0x30] sm:$0xff]
    %v144 = vld [vmem:[#allocation4 + $0x38] sm:$0xff]
    %v145 = vld [vmem:[#allocation4 + $0x40] sm:$0xff]
    %v146 = vld [vmem:[#allocation4 + $0x48] sm:$0xff]
    %v147 = vld [vmem:[#allocation4 + $0x50] sm:$0xff]
    %v148 = vld [vmem:[#allocation4 + $0x58] sm:$0xff]
    %v149 = vld [vmem:[#allocation4 + $0x60] sm:$0xff]
    %v150 = vld [vmem:[#allocation4 + $0x68] sm:$0xff]
    %v151 = vld [vmem:[#allocation4 + $0x70] sm:$0xff]
    %v152 = vld [vmem:[#allocation4 + $0x78] sm:$0xff]
    %v153 = vld [vmem:[#allocation4 + $0x80] sm:$0xff]
    %v154 = vld [vmem:[#allocation4 + $0x88] sm:$0xff]
    %v155 = vld [vmem:[#allocation4 + $0x90] sm:$0xff]
    %v156 = vld [vmem:[#allocation4 + $0x98] sm:$0xff]
    %v157 = vld [vmem:[#allocation4 + $0xa0] sm:$0xff]
    %v158 = vld [vmem:[#allocation4 + $0xa8] sm:$0xff]
    %v159 = vld [vmem:[#allocation4 + $0xb0] sm:$0xff]
    %v160 = vld [vmem:[#allocation4 + $0xb8] sm:$0xff]
    %v161 = vld [vmem:[#allocation4 + $0xc0] sm:$0xff]
    %v162 = vld [vmem:[#allocation4 + $0xc8] sm:$0xff]
    %v163 = vld [vmem:[#allocation4 + $0xd0] sm:$0xff]
    %v164 = vld [vmem:[#allocation4 + $0xd8] sm:$0xff]
    %v165 = vld [vmem:[#allocation4 + $0xe0] sm:$0xff]
    %v166 = vld [vmem:[#allocation4 + $0xe8] sm:$0xff]
    %v167 = vld [vmem:[#allocation4 + $0xf0] sm:$0xff]
    %v168 = vld [vmem:[#allocation4 + $0xf8] sm:$0xff]
    %v169 = vld [vmem:[%s4] sm:$0x3]
    %v171 = vlaneseq
    %v172 = vshrl.u32 %v171, 7
    %v173 = vsub.s32 0, %v172
    %v174 = vrot.slane %v169, %v173
    %v175 = vlaneseq
    %v176 = vshrl.u32 %v175, 7
    %v177 = vsub.s32 1, %v176
    %v178 = vrot.slane %v169, %v177
    %181 = vmatprep.subr.mxu0 %v138
    %182 = vmatpush1.msra.mxu0 %v137
    %183 = vmatprep.subr.mxu0 %v140
    %184 = vmatpush1.msra.mxu0 %v139
    %185 = vmatprep.subr.mxu0 %v142
    %186 = vmatpush1.msra.mxu0 %v141
    %187 = vmatprep.subr.mxu0 %v144
    %188 = vmatpush1.msra.mxu0 %v143
    %189 = vmatprep.subr.mxu0 %v146
    %190 = vmatpush1.msra.mxu0 %v145
    %191 = vmatprep.subr.mxu0 %v148
    %192 = vmatpush1.msra.mxu0 %v147
    %193 = vmatprep.subr.mxu0 %v150
    %194 = vmatpush1.msra.mxu0 %v149
    %195 = vmatprep.subr.mxu0 %v152
    %196 = vmatpush1.msra.mxu0 %v151
    %197 = vmatprep.subr.mxu0 %v154
    %198 = vmatpush1.msra.mxu0 %v153
    %199 = vmatprep.subr.mxu0 %v156
    %200 = vmatpush1.msra.mxu0 %v155
    %201 = vmatprep.subr.mxu0 %v158
    %202 = vmatpush1.msra.mxu0 %v157
    %203 = vmatprep.subr.mxu0 %v160
    %204 = vmatpush1.msra.mxu0 %v159
    %205 = vmatprep.subr.mxu0 %v162
    %206 = vmatpush1.msra.mxu0 %v161
    %207 = vmatprep.subr.mxu0 %v164
    %208 = vmatpush1.msra.mxu0 %v163
    %209 = vmatprep.subr.mxu0 %v166
    %210 = vmatpush1.msra.mxu0 %v165
    %211 = vmatprep.subr.mxu0 %v168
    %212 = vmatpush1.msra.mxu0 %v167
    %213 = vmatprep.subr.mxu0 0.0
    %214 = vmatpush1.msra.mxu0 0.0
    %215 = vmatprep.subr.mxu0 0.0
    %216 = vmatpush1.msra.mxu0 0.0
    %217 = vmatprep.subr.mxu0 0.0
    %218 = vmatpush1.msra.mxu0 0.0
    %219 = vmatprep.subr.mxu0 0.0
    %220 = vmatpush1.msra.mxu0 0.0
    %221 = vmatprep.subr.mxu0 0.0
    %222 = vmatpush1.msra.mxu0 0.0
    %223 = vmatprep.subr.mxu0 0.0
    %224 = vmatpush1.msra.mxu0 0.0
    %225 = vmatprep.subr.mxu0 0.0
    %226 = vmatpush1.msra.mxu0 0.0
    %227 = vmatprep.subr.mxu0 0.0
    %228 = vmatpush1.msra.mxu0 0.0
    %229 = vmatprep.subr.mxu0 0.0
    %230 = vmatpush1.msra.mxu0 0.0
    %231 = vmatprep.subr.mxu0 0.0
    %232 = vmatpush1.msra.mxu0 0.0
    %233 = vmatprep.subr.mxu0 0.0
    %234 = vmatpush1.msra.mxu0 0.0
    %235 = vmatprep.subr.mxu0 0.0
    %236 = vmatpush1.msra.mxu0 0.0
    %237 = vmatprep.subr.mxu0 0.0
    %238 = vmatpush1.msra.mxu0 0.0
    %239 = vmatprep.subr.mxu0 0.0
    %240 = vmatpush1.msra.mxu0 0.0
    %241 = vmatprep.subr.mxu0 0.0
    %242 = vmatpush1.msra.mxu0 0.0
    %243 = vmatprep.subr.mxu0 0.0
    %244 = vmatpush1.msra.mxu0 0.0
    %245 = vmatprep.mubr.f32.mxu0 0.0
    %246 = vmatmul.mubr.f32.gmra.mrb[0].mxu0 %v136
    %v247 = vpop.f32.mrb[0].mxu0
    %v248 = vadd.f32 %v174, %v247
    %v249 = vpop.f32.mrb[0].mxu0
    %v250 = vadd.f32 %v178, %v249
    %251 = vdwg.mxu0
    %252 = vst [vmem:[%s5] sm:$0xff] %v248
    %253 = vst [vmem:[%s6] sm:$0xff] %v250
    // Predicated region
    $region30: #{mlp_encoder_forward.1} parent=1 // pred_check
      _
    $region31: #{mlp_encoder_forward.1} parent=1 // pred_check_branch
      %255 = sbr.rel (0) target = $region33
    $region32: #{mlp_encoder_forward.1} parent=1 // pred_region
      _
    $region33: #{mlp_encoder_forward.1} parent=1 // pred_fallthru
      _
    // Predicated region
    $region34: #{mlp_encoder_forward.1} parent=1 // pred_check
      _
    $region35: #{mlp_encoder_forward.1} parent=1 // pred_check_branch
      %257 = sbr.rel (0) target = $region37
    $region36: #{mlp_encoder_forward.1} parent=1 // pred_region
      _
    $region37: #{mlp_encoder_forward.1} parent=1 // pred_fallthru
      _
    // Predicated region
    $region38: #{mlp_encoder_forward.1} parent=1 // pred_check
      _
    $region39: #{mlp_encoder_forward.1} parent=1 // pred_check_branch
      %259 = sbr.rel (0) target = $region41
    $region40: #{mlp_encoder_forward.1} parent=1 // pred_region
      _
    $region41: #{mlp_encoder_forward.1} parent=1 // pred_fallthru
      _
    // Predicated region
    $region42: #{mlp_encoder_forward.1} parent=1 // pred_check
      _
    $region43: #{mlp_encoder_forward.1} parent=1 // pred_check_branch
      %261 = sbr.rel (0) target = $region45
    $region44: #{mlp_encoder_forward.1} parent=1 // pred_region
      _
    $region45: #{mlp_encoder_forward.1} parent=1 // pred_fallthru
      _
    %262 = vsyncpa [#allocation3], 1
    %263 = vsyncpa [#allocation5], 1

</llo_original>
